<compile_context>
chip_gen: v5e
topology: v5e:2x2
jax: 0.10.0
libtpu: 0.0.40
codegen_flags: <defaults>
</compile_context>

<pallas_src>
import functools
import math

import jax
import jax.numpy as jnp
from jax.experimental import pallas as pl
from jax.experimental.pallas import tpu as pltpu

LATENT = 32          # hidden size of both LSTMs / encoders
TOUCH_DIM = 3
GAZE_DIM = 4


# ----------------------------------------------------------------------------
# Pallas kernel: fused LSTMs + encoders + temporal mean + decoder
# ----------------------------------------------------------------------------
def _cnp_lstm_kernel(x_ref, wih_ref, whh_ref, b_ref,
                     enc_w_ref, enc_b_ref,
                     d1_w_ref, d1_b_ref,
                     d2_w_ref, d2_b_ref,
                     out_ref, *, T, bs):
    H2 = 2 * LATENT            # fused hidden width  [touch | gaze]
    G = 8 * LATENT             # fused gate width    [i_t,i_g,f_t,f_g,g_t,g_g,o_t,o_g]

    # --- hoisted input projection: one MXU pass for all timesteps & branches,
    #     bias folded in (broadcast happens once, outside the recurrence).
    pre = (jnp.dot(x_ref[...], wih_ref[...],
                   preferred_element_type=jnp.float32)
           + b_ref[...])                                        # (T*bs, 8H)

    whh = whh_ref[...]                                          # (2H, 8H) block-diag

    h = jnp.zeros((bs, H2), jnp.float32)
    c = jnp.zeros((bs, H2), jnp.float32)
    relu_acc = jnp.zeros((bs, H2), jnp.float32)

    # --- fully unrolled recurrence: per step exactly one MXU op (h @ W_hh)
    #     and 3 EUP pushes (sigmoid + tanh over full gates, tanh(c)).
    for t in range(T):
        gates = pre[t * bs:(t + 1) * bs, :] + jnp.dot(
            h, whh, preferred_element_type=jnp.float32)         # (bs, 8H)
        sig = jax.nn.sigmoid(gates)
        tg = jnp.tanh(gates)
        i = sig[:, 0 * H2:1 * H2]        # [i_touch | i_gaze]
        f = sig[:, 1 * H2:2 * H2]        # [f_touch | f_gaze]
        g = tg[:,  2 * H2:3 * H2]        # [g_touch | g_gaze]
        o = sig[:, 3 * H2:4 * H2]        # [o_touch | o_gaze]
        c = f * c + i * g
        h = o * jnp.tanh(c)
        relu_acc = relu_acc + jnp.maximum(h, 0.0)

    # --- encoder hoisted out of the loop by linearity:
    #     mean_t(relu(h_t) @ W + b) == (mean_t relu(h_t)) @ W + b
    task = (jnp.dot(relu_acc * jnp.float32(1.0 / T), enc_w_ref[...],
                    preferred_element_type=jnp.float32)
            + enc_b_ref[...])                                   # (bs, 2H) = [touch_emb | gaze_emb]

    # --- decoder: Linear(2H,H) -> ReLU -> Linear(H,1)
    hdec = jnp.maximum(
        jnp.dot(task, d1_w_ref[...], preferred_element_type=jnp.float32)
        + d1_b_ref[...], 0.0)                                   # (bs, H)
    out_ref[...] = (jnp.dot(hdec, d2_w_ref[...],
                            preferred_element_type=jnp.float32)
                    + d2_b_ref[...])                            # (bs, 1)


# ----------------------------------------------------------------------------
# Wrapper: layout prep (branch fusion, transposes) + pallas_call
# ----------------------------------------------------------------------------
def _fuse_gate_matrix(t_mat, g_mat):
    """Fuse two per-branch gate matrices (rows_b, 4H) with PyTorch gate column
    order [i,f,g,o] into one block-structured (rows_t+rows_g, 8H) matrix whose
    fused column layout is [i_t,i_g,f_t,f_g,g_t,g_g,o_t,o_g]."""
    H = LATENT
    rt = t_mat.shape[0]
    rg = g_mat.shape[0]
    out = jnp.zeros((rt + rg, 8 * H), jnp.float32)
    for k in range(4):  # i, f, g, o
        out = out.at[:rt, (2 * k) * H:(2 * k + 1) * H].set(
            t_mat[:, k * H:(k + 1) * H])
        out = out.at[rt:, (2 * k + 1) * H:(2 * k + 2) * H].set(
            g_mat[:, k * H:(k + 1) * H])
    return out


def _fuse_gate_bias(t_b, g_b):
    H = LATENT
    parts = []
    for k in range(4):
        parts.append(t_b[k * H:(k + 1) * H])
        parts.append(g_b[k * H:(k + 1) * H])
    return jnp.concatenate(parts)[None, :]      # (1, 8H)


def asd_td_cnp_lstm_forward(touch_d, gaze_d, p):
    bs, T, _ = touch_d.shape
    H = LATENT

    # time-major, feature-fused input: (T*bs, touch_dim + gaze_dim)
    x = jnp.concatenate([touch_d, gaze_d], axis=-1).astype(jnp.float32)
    x = jnp.transpose(x, (1, 0, 2)).reshape(T * bs, TOUCH_DIM + GAZE_DIM)

    # fused (block-structured) LSTM weights for the two independent recurrences
    wih = _fuse_gate_matrix(p["t_wih"].T.astype(jnp.float32),
                            p["g_wih"].T.astype(jnp.float32))          # (7, 8H)
    whh = _fuse_gate_matrix(p["t_whh"].T.astype(jnp.float32),
                            p["g_whh"].T.astype(jnp.float32))          # (2H, 8H)
    b = _fuse_gate_bias(p["t_bih"] + p["t_bhh"],
                        p["g_bih"] + p["g_bhh"])                       # (1, 8H)

    # block-diagonal fused encoder Linear(H, H) for both branches
    enc_w = jnp.zeros((2 * H, 2 * H), jnp.float32)
    enc_w = enc_w.at[:H, :H].set(p["te_w"].T)
    enc_w = enc_w.at[H:, H:].set(p["ge_w"].T)
    enc_b = jnp.concatenate([p["te_b"], p["ge_b"]])[None, :]           # (1, 2H)

    inputs = (
        x, wih, whh, b,
        enc_w, enc_b,
        p["d1_w"].T, p["d1_b"][None, :],
        p["d2_w"].T, p["d2_b"].reshape(1, 1),
    )

    vmem_spec = pl.BlockSpec(memory_space=pltpu.MemorySpace.VMEM)
    return pl.pallas_call(
        functools.partial(_cnp_lstm_kernel, T=T, bs=bs),
        out_shape=jax.ShapeDtypeStruct((bs, 1), jnp.float32),
        in_specs=[vmem_spec] * len(inputs),
        out_specs=vmem_spec,
    )(*inputs)


# ----------------------------------------------------------------------------
# Deterministic parameter init (PyTorch default-ish uniform ranges)
# ----------------------------------------------------------------------------
def init_params(key):
    H = LATENT
    k = 1.0 / math.sqrt(H)

    def unif(key, shape, bound):
        return jax.random.uniform(key, shape, jnp.float32, -bound, bound)

    keys = jax.random.split(key, 18)
    return {
        # touch LSTM (input 3)
        "t_wih": unif(keys[0], (4 * H, TOUCH_DIM), k),
        "t_whh": unif(keys[1], (4 * H, H), k),
        "t_bih": unif(keys[2], (4 * H,), k),
        "t_bhh": unif(keys[3], (4 * H,), k),
        # gaze LSTM (input 4)
        "g_wih": unif(keys[4], (4 * H, GAZE_DIM), k),
        "g_whh": unif(keys[5], (4 * H, H), k),
        "g_bih": unif(keys[6], (4 * H,), k),
        "g_bhh": unif(keys[7], (4 * H,), k),
        # touch / gaze encoders: Linear(H, H)
        "te_w": unif(keys[8], (H, H), k),
        "te_b": unif(keys[9], (H,), k),
        "ge_w": unif(keys[10], (H, H), k),
        "ge_b": unif(keys[11], (H,), k),
        # decoder: Linear(2H, H) -> ReLU -> Linear(H, 1)
        "d1_w": unif(keys[12], (H, 2 * H), 1.0 / math.sqrt(2 * H)),
        "d1_b": unif(keys[13], (H,), 1.0 / math.sqrt(2 * H)),
        "d2_w": unif(keys[14], (1, H), k),
        "d2_b": unif(keys[15], (1,), k),
    }


# ----------------------------------------------------------------------------
# Pure-JAX reference mirroring the PyTorch forward exactly
# ----------------------------------------------------------------------------
def ref_forward(touch_d, gaze_d, p):
    H = LATENT

    def lstm(x, wih, whh, bih, bhh):
        bs, T, _ = x.shape
        h = jnp.zeros((bs, H), jnp.float32)
        c = jnp.zeros((bs, H), jnp.float32)
        outs = []
        for t in range(T):
            gates = x[:, t] @ wih.T + h @ whh.T + bih + bhh
            i = jax.nn.sigmoid(gates[:, 0 * H:1 * H])
            f = jax.nn.sigmoid(gates[:, 1 * H:2 * H])
            g = jnp.tanh(gates[:, 2 * H:3 * H])
            o = jax.nn.sigmoid(gates[:, 3 * H:4 * H])
            c = f * c + i * g
            h = o * jnp.tanh(c)
            outs.append(h)
        return jnp.stack(outs, axis=1)            # (bs, T, H)

    t_out = lstm(touch_d, p["t_wih"], p["t_whh"], p["t_bih"], p["t_bhh"])
    g_out = lstm(gaze_d, p["g_wih"], p["g_whh"], p["g_bih"], p["g_bhh"])
    t_emb = jnp.maximum(t_out, 0.0) @ p["te_w"].T + p["te_b"]
    g_emb = jnp.maximum(g_out, 0.0) @ p["ge_w"].T + p["ge_b"]
    t_emb = jnp.mean(t_emb, axis=1)
    g_emb = jnp.mean(g_emb, axis=1)
    task = jnp.concatenate([t_emb, g_emb], axis=-1)
    hdec = jnp.maximum(task @ p["d1_w"].T + p["d1_b"], 0.0)
    return hdec @ p["d2_w"].T + p["d2_b"]


if __name__ == "__main__":
    key = jax.random.PRNGKey(0)
    kp, kt, kg = jax.random.split(key, 3)

    bs, num_ts = 2, 8
    touch_d = jax.random.normal(kt, (bs, num_ts, TOUCH_DIM), jnp.float32)
    gaze_d = jax.random.normal(kg, (bs, num_ts, GAZE_DIM), jnp.float32)
    params = init_params(kp)

    pred = asd_td_cnp_lstm_forward(touch_d, gaze_d, params)
    pred = jax.block_until_ready(pred)

    ref = ref_forward(touch_d, gaze_d, params)
    assert pred.shape == (bs, 1)
    assert jnp.allclose(pred, ref, atol=1e-4, rtol=1e-4), (pred, ref)
    print("KERNEL_OK")
</pallas_src>

<mosaic_0001>
module attributes {stable_mosaic.version = 11 : i64} {
  func.func @_cnp_lstm_kernel(%arg0: memref<16x7xf32, #tpu.memory_space<vmem>>, %arg1: memref<7x256xf32, #tpu.memory_space<vmem>>, %arg2: memref<64x256xf32, #tpu.memory_space<vmem>>, %arg3: memref<1x256xf32, #tpu.memory_space<vmem>>, %arg4: memref<64x64xf32, #tpu.memory_space<vmem>>, %arg5: memref<1x64xf32, #tpu.memory_space<vmem>>, %arg6: memref<64x32xf32, #tpu.memory_space<vmem>>, %arg7: memref<1x32xf32, #tpu.memory_space<vmem>>, %arg8: memref<32x1xf32, #tpu.memory_space<vmem>>, %arg9: memref<1x1xf32, #tpu.memory_space<vmem>>, %arg10: memref<2x1xf32, #tpu.memory_space<vmem>>) attributes {dimension_semantics = [], scalar_prefetch = 0 : i64, scratch_operands = 0 : i64, tpu.core_type = #tpu.core_type<tc>} {
    %c0 = arith.constant 0 : index
    %c0_0 = arith.constant 0 : index
    %0 = vector.load %arg0[%c0, %c0_0] : memref<16x7xf32, #tpu.memory_space<vmem>>, vector<16x7xf32>
    %c0_1 = arith.constant 0 : index
    %c0_2 = arith.constant 0 : index
    %1 = vector.load %arg1[%c0_1, %c0_2] : memref<7x256xf32, #tpu.memory_space<vmem>>, vector<7x256xf32>
    %cst = arith.constant dense<0.000000e+00> : vector<16x256xf32>
    %2 = tpu.matmul %0, %1, %cst {dimension_numbers = #tpu.dot_dimension_numbers<[1], [0], [0], [1], [0, 0, 1, 1], [], []>} : vector<16x7xf32>, vector<7x256xf32>, vector<16x256xf32> -> vector<16x256xf32>
    %c0_3 = arith.constant 0 : index
    %c0_4 = arith.constant 0 : index
    %3 = vector.load %arg3[%c0_3, %c0_4] : memref<1x256xf32, #tpu.memory_space<vmem>>, vector<1x256xf32>
    %4 = vector.broadcast %3 : vector<1x256xf32> to vector<16x256xf32>
    %5 = arith.addf %2, %4 : vector<16x256xf32>
    %c0_5 = arith.constant 0 : index
    %c0_6 = arith.constant 0 : index
    %6 = vector.load %arg2[%c0_5, %c0_6] : memref<64x256xf32, #tpu.memory_space<vmem>>, vector<64x256xf32>
    %cst_7 = arith.constant 0.000000e+00 : f32
    %7 = vector.broadcast %cst_7 : f32 to vector<2x64xf32>
    %cst_8 = arith.constant 0.000000e+00 : f32
    %8 = vector.broadcast %cst_8 : f32 to vector<2x64xf32>
    %cst_9 = arith.constant 0.000000e+00 : f32
    %9 = vector.broadcast %cst_9 : f32 to vector<2x64xf32>
    %10 = vector.extract_strided_slice %5 {offsets = [0, 0], sizes = [2, 256], strides = [1, 1]} : vector<16x256xf32> to vector<2x256xf32>
    %cst_10 = arith.constant dense<0.000000e+00> : vector<2x256xf32>
    %11 = tpu.matmul %7, %6, %cst_10 {dimension_numbers = #tpu.dot_dimension_numbers<[1], [0], [0], [1], [0, 0, 1, 1], [], []>} : vector<2x64xf32>, vector<64x256xf32>, vector<2x256xf32> -> vector<2x256xf32>
    %12 = arith.addf %10, %11 : vector<2x256xf32>
    %13 = arith.negf %12 : vector<2x256xf32>
    %14 = math.exp %13 : vector<2x256xf32>
    %cst_11 = arith.constant 1.000000e+00 : f32
    %15 = vector.broadcast %cst_11 : f32 to vector<2x256xf32>
    %16 = arith.addf %15, %14 : vector<2x256xf32>
    %17 = arith.divf %15, %16 : vector<2x256xf32>
    %18 = math.tanh %12 : vector<2x256xf32>
    %19 = vector.extract_strided_slice %17 {offsets = [0, 0], sizes = [2, 64], strides = [1, 1]} : vector<2x256xf32> to vector<2x64xf32>
    %20 = vector.extract_strided_slice %17 {offsets = [0, 64], sizes = [2, 64], strides = [1, 1]} : vector<2x256xf32> to vector<2x64xf32>
    %21 = vector.extract_strided_slice %18 {offsets = [0, 128], sizes = [2, 64], strides = [1, 1]} : vector<2x256xf32> to vector<2x64xf32>
    %22 = vector.extract_strided_slice %17 {offsets = [0, 192], sizes = [2, 64], strides = [1, 1]} : vector<2x256xf32> to vector<2x64xf32>
    %23 = arith.mulf %20, %8 : vector<2x64xf32>
    %24 = arith.mulf %19, %21 : vector<2x64xf32>
    %25 = arith.addf %23, %24 : vector<2x64xf32>
    %26 = math.tanh %25 : vector<2x64xf32>
    %27 = arith.mulf %22, %26 : vector<2x64xf32>
    %cst_12 = arith.constant 0.000000e+00 : f32
    %28 = vector.broadcast %cst_12 : f32 to vector<2x64xf32>
    %29 = arith.maximumf %27, %28 : vector<2x64xf32>
    %30 = arith.addf %9, %29 : vector<2x64xf32>
    %31 = vector.extract_strided_slice %5 {offsets = [2, 0], sizes = [2, 256], strides = [1, 1]} : vector<16x256xf32> to vector<2x256xf32>
    %cst_13 = arith.constant dense<0.000000e+00> : vector<2x256xf32>
    %32 = tpu.matmul %27, %6, %cst_13 {dimension_numbers = #tpu.dot_dimension_numbers<[1], [0], [0], [1], [0, 0, 1, 1], [], []>} : vector<2x64xf32>, vector<64x256xf32>, vector<2x256xf32> -> vector<2x256xf32>
    %33 = arith.addf %31, %32 : vector<2x256xf32>
    %34 = arith.negf %33 : vector<2x256xf32>
    %35 = math.exp %34 : vector<2x256xf32>
    %cst_14 = arith.constant 1.000000e+00 : f32
    %36 = vector.broadcast %cst_14 : f32 to vector<2x256xf32>
    %37 = arith.addf %36, %35 : vector<2x256xf32>
    %38 = arith.divf %36, %37 : vector<2x256xf32>
    %39 = math.tanh %33 : vector<2x256xf32>
    %40 = vector.extract_strided_slice %38 {offsets = [0, 0], sizes = [2, 64], strides = [1, 1]} : vector<2x256xf32> to vector<2x64xf32>
    %41 = vector.extract_strided_slice %38 {offsets = [0, 64], sizes = [2, 64], strides = [1, 1]} : vector<2x256xf32> to vector<2x64xf32>
    %42 = vector.extract_strided_slice %39 {offsets = [0, 128], sizes = [2, 64], strides = [1, 1]} : vector<2x256xf32> to vector<2x64xf32>
    %43 = vector.extract_strided_slice %38 {offsets = [0, 192], sizes = [2, 64], strides = [1, 1]} : vector<2x256xf32> to vector<2x64xf32>
    %44 = arith.mulf %41, %25 : vector<2x64xf32>
    %45 = arith.mulf %40, %42 : vector<2x64xf32>
    %46 = arith.addf %44, %45 : vector<2x64xf32>
    %47 = math.tanh %46 : vector<2x64xf32>
    %48 = arith.mulf %43, %47 : vector<2x64xf32>
    %cst_15 = arith.constant 0.000000e+00 : f32
    %49 = vector.broadcast %cst_15 : f32 to vector<2x64xf32>
    %50 = arith.maximumf %48, %49 : vector<2x64xf32>
    %51 = arith.addf %30, %50 : vector<2x64xf32>
    %52 = vector.extract_strided_slice %5 {offsets = [4, 0], sizes = [2, 256], strides = [1, 1]} : vector<16x256xf32> to vector<2x256xf32>
    %cst_16 = arith.constant dense<0.000000e+00> : vector<2x256xf32>
    %53 = tpu.matmul %48, %6, %cst_16 {dimension_numbers = #tpu.dot_dimension_numbers<[1], [0], [0], [1], [0, 0, 1, 1], [], []>} : vector<2x64xf32>, vector<64x256xf32>, vector<2x256xf32> -> vector<2x256xf32>
    %54 = arith.addf %52, %53 : vector<2x256xf32>
    %55 = arith.negf %54 : vector<2x256xf32>
    %56 = math.exp %55 : vector<2x256xf32>
    %cst_17 = arith.constant 1.000000e+00 : f32
    %57 = vector.broadcast %cst_17 : f32 to vector<2x256xf32>
    %58 = arith.addf %57, %56 : vector<2x256xf32>
    %59 = arith.divf %57, %58 : vector<2x256xf32>
    %60 = math.tanh %54 : vector<2x256xf32>
    %61 = vector.extract_strided_slice %59 {offsets = [0, 0], sizes = [2, 64], strides = [1, 1]} : vector<2x256xf32> to vector<2x64xf32>
    %62 = vector.extract_strided_slice %59 {offsets = [0, 64], sizes = [2, 64], strides = [1, 1]} : vector<2x256xf32> to vector<2x64xf32>
    %63 = vector.extract_strided_slice %60 {offsets = [0, 128], sizes = [2, 64], strides = [1, 1]} : vector<2x256xf32> to vector<2x64xf32>
    %64 = vector.extract_strided_slice %59 {offsets = [0, 192], sizes = [2, 64], strides = [1, 1]} : vector<2x256xf32> to vector<2x64xf32>
    %65 = arith.mulf %62, %46 : vector<2x64xf32>
    %66 = arith.mulf %61, %63 : vector<2x64xf32>
    %67 = arith.addf %65, %66 : vector<2x64xf32>
    %68 = math.tanh %67 : vector<2x64xf32>
    %69 = arith.mulf %64, %68 : vector<2x64xf32>
    %cst_18 = arith.constant 0.000000e+00 : f32
    %70 = vector.broadcast %cst_18 : f32 to vector<2x64xf32>
    %71 = arith.maximumf %69, %70 : vector<2x64xf32>
    %72 = arith.addf %51, %71 : vector<2x64xf32>
    %73 = vector.extract_strided_slice %5 {offsets = [6, 0], sizes = [2, 256], strides = [1, 1]} : vector<16x256xf32> to vector<2x256xf32>
    %cst_19 = arith.constant dense<0.000000e+00> : vector<2x256xf32>
    %74 = tpu.matmul %69, %6, %cst_19 {dimension_numbers = #tpu.dot_dimension_numbers<[1], [0], [0], [1], [0, 0, 1, 1], [], []>} : vector<2x64xf32>, vector<64x256xf32>, vector<2x256xf32> -> vector<2x256xf32>
    %75 = arith.addf %73, %74 : vector<2x256xf32>
    %76 = arith.negf %75 : vector<2x256xf32>
    %77 = math.exp %76 : vector<2x256xf32>
    %cst_20 = arith.constant 1.000000e+00 : f32
    %78 = vector.broadcast %cst_20 : f32 to vector<2x256xf32>
    %79 = arith.addf %78, %77 : vector<2x256xf32>
    %80 = arith.divf %78, %79 : vector<2x256xf32>
    %81 = math.tanh %75 : vector<2x256xf32>
    %82 = vector.extract_strided_slice %80 {offsets = [0, 0], sizes = [2, 64], strides = [1, 1]} : vector<2x256xf32> to vector<2x64xf32>
    %83 = vector.extract_strided_slice %80 {offsets = [0, 64], sizes = [2, 64], strides = [1, 1]} : vector<2x256xf32> to vector<2x64xf32>
    %84 = vector.extract_strided_slice %81 {offsets = [0, 128], sizes = [2, 64], strides = [1, 1]} : vector<2x256xf32> to vector<2x64xf32>
    %85 = vector.extract_strided_slice %80 {offsets = [0, 192], sizes = [2, 64], strides = [1, 1]} : vector<2x256xf32> to vector<2x64xf32>
    %86 = arith.mulf %83, %67 : vector<2x64xf32>
    %87 = arith.mulf %82, %84 : vector<2x64xf32>
    %88 = arith.addf %86, %87 : vector<2x64xf32>
    %89 = math.tanh %88 : vector<2x64xf32>
    %90 = arith.mulf %85, %89 : vector<2x64xf32>
    %cst_21 = arith.constant 0.000000e+00 : f32
    %91 = vector.broadcast %cst_21 : f32 to vector<2x64xf32>
    %92 = arith.maximumf %90, %91 : vector<2x64xf32>
    %93 = arith.addf %72, %92 : vector<2x64xf32>
    %94 = vector.extract_strided_slice %5 {offsets = [8, 0], sizes = [2, 256], strides = [1, 1]} : vector<16x256xf32> to vector<2x256xf32>
    %cst_22 = arith.constant dense<0.000000e+00> : vector<2x256xf32>
    %95 = tpu.matmul %90, %6, %cst_22 {dimension_numbers = #tpu.dot_dimension_numbers<[1], [0], [0], [1], [0, 0, 1, 1], [], []>} : vector<2x64xf32>, vector<64x256xf32>, vector<2x256xf32> -> vector<2x256xf32>
    %96 = arith.addf %94, %95 : vector<2x256xf32>
    %97 = arith.negf %96 : vector<2x256xf32>
    %98 = math.exp %97 : vector<2x256xf32>
    %cst_23 = arith.constant 1.000000e+00 : f32
    %99 = vector.broadcast %cst_23 : f32 to vector<2x256xf32>
    %100 = arith.addf %99, %98 : vector<2x256xf32>
    %101 = arith.divf %99, %100 : vector<2x256xf32>
    %102 = math.tanh %96 : vector<2x256xf32>
    %103 = vector.extract_strided_slice %101 {offsets = [0, 0], sizes = [2, 64], strides = [1, 1]} : vector<2x256xf32> to vector<2x64xf32>
    %104 = vector.extract_strided_slice %101 {offsets = [0, 64], sizes = [2, 64], strides = [1, 1]} : vector<2x256xf32> to vector<2x64xf32>
    %105 = vector.extract_strided_slice %102 {offsets = [0, 128], sizes = [2, 64], strides = [1, 1]} : vector<2x256xf32> to vector<2x64xf32>
    %106 = vector.extract_strided_slice %101 {offsets = [0, 192], sizes = [2, 64], strides = [1, 1]} : vector<2x256xf32> to vector<2x64xf32>
    %107 = arith.mulf %104, %88 : vector<2x64xf32>
    %108 = arith.mulf %103, %105 : vector<2x64xf32>
    %109 = arith.addf %107, %108 : vector<2x64xf32>
    %110 = math.tanh %109 : vector<2x64xf32>
    %111 = arith.mulf %106, %110 : vector<2x64xf32>
    %cst_24 = arith.constant 0.000000e+00 : f32
    %112 = vector.broadcast %cst_24 : f32 to vector<2x64xf32>
    %113 = arith.maximumf %111, %112 : vector<2x64xf32>
    %114 = arith.addf %93, %113 : vector<2x64xf32>
    %115 = vector.extract_strided_slice %5 {offsets = [10, 0], sizes = [2, 256], strides = [1, 1]} : vector<16x256xf32> to vector<2x256xf32>
    %cst_25 = arith.constant dense<0.000000e+00> : vector<2x256xf32>
    %116 = tpu.matmul %111, %6, %cst_25 {dimension_numbers = #tpu.dot_dimension_numbers<[1], [0], [0], [1], [0, 0, 1, 1], [], []>} : vector<2x64xf32>, vector<64x256xf32>, vector<2x256xf32> -> vector<2x256xf32>
    %117 = arith.addf %115, %116 : vector<2x256xf32>
    %118 = arith.negf %117 : vector<2x256xf32>
    %119 = math.exp %118 : vector<2x256xf32>
    %cst_26 = arith.constant 1.000000e+00 : f32
    %120 = vector.broadcast %cst_26 : f32 to vector<2x256xf32>
    %121 = arith.addf %120, %119 : vector<2x256xf32>
    %122 = arith.divf %120, %121 : vector<2x256xf32>
    %123 = math.tanh %117 : vector<2x256xf32>
    %124 = vector.extract_strided_slice %122 {offsets = [0, 0], sizes = [2, 64], strides = [1, 1]} : vector<2x256xf32> to vector<2x64xf32>
    %125 = vector.extract_strided_slice %122 {offsets = [0, 64], sizes = [2, 64], strides = [1, 1]} : vector<2x256xf32> to vector<2x64xf32>
    %126 = vector.extract_strided_slice %123 {offsets = [0, 128], sizes = [2, 64], strides = [1, 1]} : vector<2x256xf32> to vector<2x64xf32>
    %127 = vector.extract_strided_slice %122 {offsets = [0, 192], sizes = [2, 64], strides = [1, 1]} : vector<2x256xf32> to vector<2x64xf32>
    %128 = arith.mulf %125, %109 : vector<2x64xf32>
    %129 = arith.mulf %124, %126 : vector<2x64xf32>
    %130 = arith.addf %128, %129 : vector<2x64xf32>
    %131 = math.tanh %130 : vector<2x64xf32>
    %132 = arith.mulf %127, %131 : vector<2x64xf32>
    %cst_27 = arith.constant 0.000000e+00 : f32
    %133 = vector.broadcast %cst_27 : f32 to vector<2x64xf32>
    %134 = arith.maximumf %132, %133 : vector<2x64xf32>
    %135 = arith.addf %114, %134 : vector<2x64xf32>
    %136 = vector.extract_strided_slice %5 {offsets = [12, 0], sizes = [2, 256], strides = [1, 1]} : vector<16x256xf32> to vector<2x256xf32>
    %cst_28 = arith.constant dense<0.000000e+00> : vector<2x256xf32>
    %137 = tpu.matmul %132, %6, %cst_28 {dimension_numbers = #tpu.dot_dimension_numbers<[1], [0], [0], [1], [0, 0, 1, 1], [], []>} : vector<2x64xf32>, vector<64x256xf32>, vector<2x256xf32> -> vector<2x256xf32>
    %138 = arith.addf %136, %137 : vector<2x256xf32>
    %139 = arith.negf %138 : vector<2x256xf32>
    %140 = math.exp %139 : vector<2x256xf32>
    %cst_29 = arith.constant 1.000000e+00 : f32
    %141 = vector.broadcast %cst_29 : f32 to vector<2x256xf32>
    %142 = arith.addf %141, %140 : vector<2x256xf32>
    %143 = arith.divf %141, %142 : vector<2x256xf32>
    %144 = math.tanh %138 : vector<2x256xf32>
    %145 = vector.extract_strided_slice %143 {offsets = [0, 0], sizes = [2, 64], strides = [1, 1]} : vector<2x256xf32> to vector<2x64xf32>
    %146 = vector.extract_strided_slice %143 {offsets = [0, 64], sizes = [2, 64], strides = [1, 1]} : vector<2x256xf32> to vector<2x64xf32>
    %147 = vector.extract_strided_slice %144 {offsets = [0, 128], sizes = [2, 64], strides = [1, 1]} : vector<2x256xf32> to vector<2x64xf32>
    %148 = vector.extract_strided_slice %143 {offsets = [0, 192], sizes = [2, 64], strides = [1, 1]} : vector<2x256xf32> to vector<2x64xf32>
    %149 = arith.mulf %146, %130 : vector<2x64xf32>
    %150 = arith.mulf %145, %147 : vector<2x64xf32>
    %151 = arith.addf %149, %150 : vector<2x64xf32>
    %152 = math.tanh %151 : vector<2x64xf32>
    %153 = arith.mulf %148, %152 : vector<2x64xf32>
    %cst_30 = arith.constant 0.000000e+00 : f32
    %154 = vector.broadcast %cst_30 : f32 to vector<2x64xf32>
    %155 = arith.maximumf %153, %154 : vector<2x64xf32>
    %156 = arith.addf %135, %155 : vector<2x64xf32>
    %157 = vector.extract_strided_slice %5 {offsets = [14, 0], sizes = [2, 256], strides = [1, 1]} : vector<16x256xf32> to vector<2x256xf32>
    %cst_31 = arith.constant dense<0.000000e+00> : vector<2x256xf32>
    %158 = tpu.matmul %153, %6, %cst_31 {dimension_numbers = #tpu.dot_dimension_numbers<[1], [0], [0], [1], [0, 0, 1, 1], [], []>} : vector<2x64xf32>, vector<64x256xf32>, vector<2x256xf32> -> vector<2x256xf32>
    %159 = arith.addf %157, %158 : vector<2x256xf32>
    %160 = arith.negf %159 : vector<2x256xf32>
    %161 = math.exp %160 : vector<2x256xf32>
    %cst_32 = arith.constant 1.000000e+00 : f32
    %162 = vector.broadcast %cst_32 : f32 to vector<2x256xf32>
    %163 = arith.addf %162, %161 : vector<2x256xf32>
    %164 = arith.divf %162, %163 : vector<2x256xf32>
    %165 = math.tanh %159 : vector<2x256xf32>
    %166 = vector.extract_strided_slice %164 {offsets = [0, 0], sizes = [2, 64], strides = [1, 1]} : vector<2x256xf32> to vector<2x64xf32>
    %167 = vector.extract_strided_slice %164 {offsets = [0, 64], sizes = [2, 64], strides = [1, 1]} : vector<2x256xf32> to vector<2x64xf32>
    %168 = vector.extract_strided_slice %165 {offsets = [0, 128], sizes = [2, 64], strides = [1, 1]} : vector<2x256xf32> to vector<2x64xf32>
    %169 = vector.extract_strided_slice %164 {offsets = [0, 192], sizes = [2, 64], strides = [1, 1]} : vector<2x256xf32> to vector<2x64xf32>
    %170 = arith.mulf %167, %151 : vector<2x64xf32>
    %171 = arith.mulf %166, %168 : vector<2x64xf32>
    %172 = arith.addf %170, %171 : vector<2x64xf32>
    %173 = math.tanh %172 : vector<2x64xf32>
    %174 = arith.mulf %169, %173 : vector<2x64xf32>
    %cst_33 = arith.constant 0.000000e+00 : f32
    %175 = vector.broadcast %cst_33 : f32 to vector<2x64xf32>
    %176 = arith.maximumf %174, %175 : vector<2x64xf32>
    %177 = arith.addf %156, %176 : vector<2x64xf32>
    %cst_34 = arith.constant 1.250000e-01 : f32
    %178 = vector.broadcast %cst_34 : f32 to vector<2x64xf32>
    %179 = arith.mulf %177, %178 : vector<2x64xf32>
    %c0_35 = arith.constant 0 : index
    %c0_36 = arith.constant 0 : index
    %180 = vector.load %arg4[%c0_35, %c0_36] : memref<64x64xf32, #tpu.memory_space<vmem>>, vector<64x64xf32>
    %cst_37 = arith.constant dense<0.000000e+00> : vector<2x64xf32>
    %181 = tpu.matmul %179, %180, %cst_37 {dimension_numbers = #tpu.dot_dimension_numbers<[1], [0], [0], [1], [0, 0, 1, 1], [], []>} : vector<2x64xf32>, vector<64x64xf32>, vector<2x64xf32> -> vector<2x64xf32>
    %c0_38 = arith.constant 0 : index
    %c0_39 = arith.constant 0 : index
    %182 = vector.load %arg5[%c0_38, %c0_39] : memref<1x64xf32, #tpu.memory_space<vmem>>, vector<1x64xf32>
    %183 = vector.broadcast %182 : vector<1x64xf32> to vector<2x64xf32>
    %184 = arith.addf %181, %183 : vector<2x64xf32>
    %c0_40 = arith.constant 0 : index
    %c0_41 = arith.constant 0 : index
    %185 = vector.load %arg6[%c0_40, %c0_41] : memref<64x32xf32, #tpu.memory_space<vmem>>, vector<64x32xf32>
    %cst_42 = arith.constant dense<0.000000e+00> : vector<2x32xf32>
    %186 = tpu.matmul %184, %185, %cst_42 {dimension_numbers = #tpu.dot_dimension_numbers<[1], [0], [0], [1], [0, 0, 1, 1], [], []>} : vector<2x64xf32>, vector<64x32xf32>, vector<2x32xf32> -> vector<2x32xf32>
    %c0_43 = arith.constant 0 : index
    %c0_44 = arith.constant 0 : index
    %187 = vector.load %arg7[%c0_43, %c0_44] : memref<1x32xf32, #tpu.memory_space<vmem>>, vector<1x32xf32>
    %188 = vector.broadcast %187 : vector<1x32xf32> to vector<2x32xf32>
    %189 = arith.addf %186, %188 : vector<2x32xf32>
    %cst_45 = arith.constant 0.000000e+00 : f32
    %190 = vector.broadcast %cst_45 : f32 to vector<2x32xf32>
    %191 = arith.maximumf %189, %190 : vector<2x32xf32>
    %c0_46 = arith.constant 0 : index
    %c0_47 = arith.constant 0 : index
    %192 = vector.load %arg8[%c0_46, %c0_47] : memref<32x1xf32, #tpu.memory_space<vmem>>, vector<32x1xf32>
    %cst_48 = arith.constant dense<0.000000e+00> : vector<2x1xf32>
    %193 = tpu.matmul %191, %192, %cst_48 {dimension_numbers = #tpu.dot_dimension_numbers<[1], [0], [0], [1], [0, 0, 1, 1], [], []>} : vector<2x32xf32>, vector<32x1xf32>, vector<2x1xf32> -> vector<2x1xf32>
    %c0_49 = arith.constant 0 : index
    %c0_50 = arith.constant 0 : index
    %194 = vector.load %arg9[%c0_49, %c0_50] : memref<1x1xf32, #tpu.memory_space<vmem>>, vector<1x1xf32>
    %195 = vector.broadcast %194 : vector<1x1xf32> to vector<2x1xf32>
    %196 = arith.addf %193, %195 : vector<2x1xf32>
    %c0_51 = arith.constant 0 : index
    %c0_52 = arith.constant 0 : index
    %197 = vector.load %arg10[%c0_51, %c0_52] : memref<2x1xf32, #tpu.memory_space<vmem>>, vector<2x1xf32>
    tpu.vector_store %arg10[%c0_51, %c0_52], %196 {strides = array<i32>} : memref<2x1xf32, #tpu.memory_space<vmem>>, vector<2x1xf32>,
    return
  }
}

</mosaic_0001>

<llo_original>
// kernel: tpu_custom_call.1
$region0: #{tpu_custom_call.1}
  #allocation0 [shape = 'u32[]', space=smem, size = 0x4, offset = 0x4, fixed_abs, tag = 'smem constant byte address 0x4 - core index']
  #allocation1 [shape = 'u32[72,128]{1,0:T(1,128)}', space=vmem, size = 0x9000, scoped, tag = 'internal scratch']
  #allocation2 [shape = 'f32[1,1]{1,0:T(1,128)S(1)}', space=vmem, size = 0x200, scoped, tag = 'scoped memory for tpu_custom_call.1']
  %s0 = inlined_call_operand.vmem [shape: f32[16,7], index: 0, kind: input, shape index: {}]
  %s1 = inlined_call_operand.vmem [shape: f32[7,256], index: 1, kind: input, shape index: {}]
  %s2 = inlined_call_operand.hbm [shape: f32[64,256], index: 2, kind: input, shape index: {}]
  %s3 = inlined_call_operand.vmem [shape: f32[1,256], index: 3, kind: input, shape index: {}]
  %s4 = inlined_call_operand.vmem [shape: f32[64,64], index: 4, kind: input, shape index: {}]
  %s5 = inlined_call_operand.vmem [shape: f32[1,64], index: 5, kind: input, shape index: {}]
  %s6 = inlined_call_operand.vmem [shape: f32[64,32], index: 6, kind: input, shape index: {}]
  %s7 = inlined_call_operand.vmem [shape: f32[1,32], index: 7, kind: input, shape index: {}]
  %s8 = inlined_call_operand.vmem [shape: f32[32,1], index: 8, kind: input, shape index: {}]
  %s9 = inlined_call_operand.<no memory space> [shape: f32[1,1], index: 9, kind: input, shape index: {}]
  %s10 = inlined_call_operand.vmem [shape: f32[2,1], index: 10, kind: output, shape index: {}]
  %s11 = sld [smem:[#allocation0]]
  $region54: #{tpu_custom_call.1} parent=0
    _
  %s13 = ssub.s32 1, %s11
  %s14 = scalar_select 0, %s13, %s11
  %v15 = vstv %s9
  %16 = vst [vmem:[#allocation2] sm:$0x1] %v15
  $region1: #{tpu_custom_call.1} parent=0
    #allocation3 [shape = 'u8[65536]{0}', space=vmem, size = 0x10000, scoped, tag = 'input window, operand 2, single buffered']
    #allocation4 [shape = 's32[1]{0}', space=sflag, size = 0x4, scoped, tag = 'scoped memory for tpu_custom_call.1']
    %17 = vsyncpa [#allocation4], 0
    // Predicated region
    $region2: #{tpu_custom_call.1} parent=1 // pred_check
      _
    $region3: #{tpu_custom_call.1} parent=1 // pred_check_branch
      %19 = sbr.rel (0) target = $region5
    $region4: #{tpu_custom_call.1} parent=1 // pred_region
      _
    $region5: #{tpu_custom_call.1} parent=1 // pred_fallthru
      _
    // Predicated region
    $region6: #{tpu_custom_call.1} parent=1 // pred_check
      _
    $region7: #{tpu_custom_call.1} parent=1 // pred_check_branch
      %21 = sbr.rel (0) target = $region9
    $region8: #{tpu_custom_call.1} parent=1 // pred_region
      _
    $region9: #{tpu_custom_call.1} parent=1 // pred_fallthru
      _
    // Predicated region
    $region10: #{tpu_custom_call.1} parent=1 // pred_check
      _
    $region11: #{tpu_custom_call.1} parent=1 // pred_check_branch
      %23 = sbr.rel (0) target = $region13
    $region12: #{tpu_custom_call.1} parent=1 // pred_region
      %25 = vsyncadd [#allocation4], 0
      %s26 = sshll.u32 %s2, 4
      %s27 = int_to_ptr.hbm [resolvable:$true] %s26
      %s28 = sshll.u32 [#allocation3], 4
      %s29 = int_to_ptr.vmem [resolvable:$true] %s28
      %34 = dma.hbm_to_vmem [thread:$0]  %s27, 2048, %s29, [#allocation4], 256, 256, 16
    $region13: #{tpu_custom_call.1} parent=1 // pred_fallthru
      _
    // Predicated region
    $region14: #{tpu_custom_call.1} parent=1 // pred_check
      _
    $region15: #{tpu_custom_call.1} parent=1 // pred_check_branch
      %36 = sbr.rel (0) target = $region17
    $region16: #{tpu_custom_call.1} parent=1 // pred_region
      _
    $region17: #{tpu_custom_call.1} parent=1 // pred_fallthru
      _
    // Predicated region
    $region18: #{tpu_custom_call.1} parent=1 // pred_check
      _
    $region19: #{tpu_custom_call.1} parent=1 // pred_check_branch
      %38 = sbr.rel (0) target = $region21
    $region20: #{tpu_custom_call.1} parent=1 // pred_region
      _
    $region21: #{tpu_custom_call.1} parent=1 // pred_fallthru
      _
    // Predicated region
    $region22: #{tpu_custom_call.1} parent=1 // pred_check
      _
    $region23: #{tpu_custom_call.1} parent=1 // pred_check_branch
      %40 = sbr.rel (0) target = $region25
    $region24: #{tpu_custom_call.1} parent=1 // pred_region
      _
    $region25: #{tpu_custom_call.1} parent=1 // pred_fallthru
      _
    // Predicated region
    $region26: #{tpu_custom_call.1} parent=1 // pred_check
      _
    $region27: #{tpu_custom_call.1} parent=1 // pred_check_branch
      %42 = sbr.rel (0) target = $region29
    $region28: #{tpu_custom_call.1} parent=1 // pred_region
      _
    $region29: #{tpu_custom_call.1} parent=1 // pred_fallthru
      _
    // Predicated region
    $region30: #{tpu_custom_call.1} parent=1 // pred_check
      _
    $region31: #{tpu_custom_call.1} parent=1 // pred_check_branch
      %44 = sbr.rel (0) target = $region33
    $region32: #{tpu_custom_call.1} parent=1 // pred_region
      _
    $region33: #{tpu_custom_call.1} parent=1 // pred_fallthru
      _
    // Predicated region
    $region34: #{tpu_custom_call.1} parent=1 // pred_check
      _
    $region35: #{tpu_custom_call.1} parent=1 // pred_check_branch
      %46 = sbr.rel (0) target = $region37
    $region36: #{tpu_custom_call.1} parent=1 // pred_region
      _
    $region37: #{tpu_custom_call.1} parent=1 // pred_fallthru
      _
    // Predicated region
    $region38: #{tpu_custom_call.1} parent=1 // pred_check
      _
    $region39: #{tpu_custom_call.1} parent=1 // pred_check_branch
      %48 = sbr.rel (0) target = $region41
    $region40: #{tpu_custom_call.1} parent=1 // pred_region
      _
    $region41: #{tpu_custom_call.1} parent=1 // pred_fallthru
      _
    // Predicated region
    $region42: #{tpu_custom_call.1} parent=1 // pred_check
      _
    $region43: #{tpu_custom_call.1} parent=1 // pred_check_branch
      %50 = sbr.rel (0) target = $region45
    $region44: #{tpu_custom_call.1} parent=1 // pred_region
      %52 = dma.done [#allocation4], 2048
    $region45: #{tpu_custom_call.1} parent=1 // pred_fallthru
      _
    %v53 = vld [vmem:[%s0] sm:$0xff]
    %v54 = vld [vmem:[%s0 + $0x8] sm:$0xff]
    %v55 = vld [vmem:[%s1] sm:$0x7f]
    %v56 = vld [vmem:[%s1 + $0x8] sm:$0x7f]
    %v57 = vld [vmem:[%s3] sm:$0x3]
    %v59 = vperm.slane %v57, 0
    %v60 = vperm.slane %v57, 1
    %vm63 = vcmask 56320
    %v65 = vsel %vm63, %v53, 0
    %v68 = vsel %vm63, %v54, 0
    %vm70 = vcmask 1046528
    %v72 = vsel %vm70, %v55, 0
    %v75 = vsel %vm70, %v56, 0
    %77 = vmatpush.msra.mxu0 0.0
    %78 = vmatpush.msra.mxu0 0.0
    %79 = vmatpush.msra.mxu0 0.0
    %80 = vmatpush.msra.mxu0 0.0
    %81 = vmatpush.msra.mxu0 0.0
    %82 = vmatpush.msra.mxu0 0.0
    %83 = vmatpush.msra.mxu0 0.0
    %84 = vmatpush.msra.mxu0 0.0
    %85 = vmatpush.msra.mxu0 0.0
    %86 = vmatpush.msra.mxu0 0.0
    %87 = vmatpush.msra.mxu0 0.0
    %88 = vmatpush.msra.mxu0 0.0
    %89 = vmatpush.msra.mxu0 0.0
    %90 = vmatpush.msra.mxu0 0.0
    %91 = vmatpush.msra.mxu0 0.0
    %92 = vmatpush.msra.mxu0 %v72
    %93 = vmatmul.f32.gmra.mxu0 %v65
    %v94 = vpop.f32.mrf.mxu0
    %v95 = vadd.f32 %v59, %v94
    %96 = vmatmul.f32.gmra.mxu0 %v68
    %v97 = vpop.f32.mrf.mxu0
    %v98 = vadd.f32 %v59, %v97
    %99 = vdwg.mxu0
    %100 = vmatpush.msra.mxu0 0.0
    %101 = vmatpush.msra.mxu0 0.0
    %102 = vmatpush.msra.mxu0 0.0
    %103 = vmatpush.msra.mxu0 0.0
    %104 = vmatpush.msra.mxu0 0.0
    %105 = vmatpush.msra.mxu0 0.0
    %106 = vmatpush.msra.mxu0 0.0
    %107 = vmatpush.msra.mxu0 0.0
    %108 = vmatpush.msra.mxu0 0.0
    %109 = vmatpush.msra.mxu0 0.0
    %110 = vmatpush.msra.mxu0 0.0
    %111 = vmatpush.msra.mxu0 0.0
    %112 = vmatpush.msra.mxu0 0.0
    %113 = vmatpush.msra.mxu0 0.0
    %114 = vmatpush.msra.mxu0 0.0
    %115 = vmatpush.msra.mxu0 %v75
    %116 = vmatmul.f32.gmra.mxu0 %v65
    %v117 = vpop.f32.mrf.mxu0
    %v118 = vadd.f32 %v60, %v117
    %119 = vmatmul.f32.gmra.mxu0 %v68
    %v120 = vpop.f32.mrf.mxu0
    %v121 = vadd.f32 %v60, %v120
    %122 = vdwg.mxu0
    %v123 = vld [vmem:[#allocation3] sm:$0xff]
    %v124 = vld [vmem:[#allocation3 + $0x8] sm:$0xff]
    %v125 = vld [vmem:[#allocation3 + $0x10] sm:$0xff]
    %v126 = vld [vmem:[#allocation3 + $0x18] sm:$0xff]
    %v127 = vld [vmem:[#allocation3 + $0x20] sm:$0xff]
    %v128 = vld [vmem:[#allocation3 + $0x28] sm:$0xff]
    %v129 = vld [vmem:[#allocation3 + $0x30] sm:$0xff]
    %v130 = vld [vmem:[#allocation3 + $0x38] sm:$0xff]
    %v131 = vld [vmem:[#allocation3 + $0x40] sm:$0xff]
    %v132 = vld [vmem:[#allocation3 + $0x48] sm:$0xff]
    %v133 = vld [vmem:[#allocation3 + $0x50] sm:$0xff]
    %v134 = vld [vmem:[#allocation3 + $0x58] sm:$0xff]
    %v135 = vld [vmem:[#allocation3 + $0x60] sm:$0xff]
    %v136 = vld [vmem:[#allocation3 + $0x68] sm:$0xff]
    %v137 = vld [vmem:[#allocation3 + $0x70] sm:$0xff]
    %v138 = vld [vmem:[#allocation3 + $0x78] sm:$0xff]
    %vm139 = vcmask 523264
    %v141 = vsel %vm139, 0.0, 0
    %143 = vmatpush.msra.mxu0 0.0
    %144 = vmatpush.msra.mxu0 0.0
    %145 = vmatpush.msra.mxu0 0.0
    %146 = vmatpush.msra.mxu0 0.0
    %147 = vmatpush.msra.mxu0 0.0
    %148 = vmatpush.msra.mxu0 0.0
    %149 = vmatpush.msra.mxu0 0.0
    %150 = vmatpush.msra.mxu0 0.0
    %151 = vmatpush.msra.mxu0 %v137
    %152 = vmatpush.msra.mxu0 %v135
    %153 = vmatpush.msra.mxu0 %v133
    %154 = vmatpush.msra.mxu0 %v131
    %155 = vmatpush.msra.mxu0 %v129
    %156 = vmatpush.msra.mxu0 %v127
    %157 = vmatpush.msra.mxu0 %v125
    %158 = vmatpush.msra.mxu0 %v123
    %159 = vmatmul.f32.gmra.mxu0 %v141
    %v160 = vpop.f32.mrf.mxu0
    %v161 = vadd.f32 0.0, %v160
    %162 = vdwg.mxu0
    %163 = vmatpush.msra.mxu0 0.0
    %164 = vmatpush.msra.mxu0 0.0
    %165 = vmatpush.msra.mxu0 0.0
    %166 = vmatpush.msra.mxu0 0.0
    %167 = vmatpush.msra.mxu0 0.0
    %168 = vmatpush.msra.mxu0 0.0
    %169 = vmatpush.msra.mxu0 0.0
    %170 = vmatpush.msra.mxu0 0.0
    %171 = vmatpush.msra.mxu0 %v138
    %172 = vmatpush.msra.mxu0 %v136
    %173 = vmatpush.msra.mxu0 %v134
    %174 = vmatpush.msra.mxu0 %v132
    %175 = vmatpush.msra.mxu0 %v130
    %176 = vmatpush.msra.mxu0 %v128
    %177 = vmatpush.msra.mxu0 %v126
    %178 = vmatpush.msra.mxu0 %v124
    %179 = vmatmul.f32.gmra.mxu0 %v141
    %v180 = vpop.f32.mrf.mxu0
    %v181 = vadd.f32 0.0, %v180
    %182 = vdwg.mxu0
    %v183 = vadd.f32 %v95, %v161
    %v184 = vadd.f32 %v118, %v181
    %v185 = vxor.u32 %v183, 2147483648
    %v186 = vxor.u32 %v184, 2147483648
    %v187 = vmul.f32 %v185, 1.442695
    %v188 = vpow.pop %v187
    %v189 = vmul.f32 %v186, 1.442695
    %v190 = vpow.pop %v189
    %v191 = vadd.f32 %v188, 1.0
    %v192 = vadd.f32 %v190, 1.0
    %v193 = vrcp.pop %v191
    %v194 = vmul.f32 %v191, %v193
    %v195 = vsub.f32 1.0, %v194
    %v196 = vmul.f32 %v193, %v195
    %v197 = vadd.f32 %v193, %v196
    %vm198 = vweird.f32 %v191
    %vm199 = vweird.f32 %v193
    %vm200 = vmor %vm198, %vm199
    %v201 = vsel %vm200, %v193, %v197
    %v202 = vand.u32 2147483647, %v191
    %vm203 = vcmp.eq.f32.partialorder %v202, 8.507059e+37
    %v204 = vand.u32 %v191, 2147483648
    %v205 = vor.u32 1.1754944e-38, %v204
    %v206 = vsel %vm203, %v205, %v201
    %v207 = vmul.f32 1.0, %v206
    %v208 = vrcp.pop %v192
    %v209 = vmul.f32 %v192, %v208
    %v210 = vsub.f32 1.0, %v209
    %v211 = vmul.f32 %v208, %v210
    %v212 = vadd.f32 %v208, %v211
    %vm213 = vweird.f32 %v192
    %vm214 = vweird.f32 %v208
    %vm215 = vmor %vm213, %vm214
    %v216 = vsel %vm215, %v208, %v212
    %v217 = vand.u32 2147483647, %v192
    %vm218 = vcmp.eq.f32.partialorder %v217, 8.507059e+37
    %v219 = vand.u32 %v192, 2147483648
    %v220 = vor.u32 1.1754944e-38, %v219
    %v221 = vsel %vm218, %v220, %v216
    %v222 = vmul.f32 1.0, %v221
    %v223 = vtanh.pop %v184
    %v224 = vmul.f32 %v207, 0.0
    %v225 = vmul.f32 %v207, %v223
    %227 = vrot.lane.b32.xlu0 %v225, 64
    %v228 = vpop.permute.xlu0 %227
    %v230 = vadd.f32 %v224, %v228
    %v231 = vtanh.pop %v230
    %v232 = vmul.f32 %v222, %v231
    %v233 = vmax.f32 %v232, 0.0
    %v234 = vadd.f32 %v233, 0.0
    %236 = vrot.lane.b32.xlu0 %v232, 64
    %v237 = vpop.permute.xlu0 %236
    %v238 = vsel %vm139, %v237, 0
    %240 = vmatpush.msra.mxu0 0.0
    %241 = vmatpush.msra.mxu0 0.0
    %242 = vmatpush.msra.mxu0 0.0
    %243 = vmatpush.msra.mxu0 0.0
    %244 = vmatpush.msra.mxu0 0.0
    %245 = vmatpush.msra.mxu0 0.0
    %246 = vmatpush.msra.mxu0 0.0
    %247 = vmatpush.msra.mxu0 0.0
    %248 = vmatpush.msra.mxu0 %v137
    %249 = vmatpush.msra.mxu0 %v135
    %250 = vmatpush.msra.mxu0 %v133
    %251 = vmatpush.msra.mxu0 %v131
    %252 = vmatpush.msra.mxu0 %v129
    %253 = vmatpush.msra.mxu0 %v127
    %254 = vmatpush.msra.mxu0 %v125
    %255 = vmatpush.msra.mxu0 %v123
    %256 = vmatmul.f32.gmra.mxu0 %v238
    %v257 = vpop.f32.mrf.mxu0
    %v258 = vadd.f32 0.0, %v257
    %259 = vdwg.mxu0
    %260 = vmatpush.msra.mxu0 0.0
    %261 = vmatpush.msra.mxu0 0.0
    %262 = vmatpush.msra.mxu0 0.0
    %263 = vmatpush.msra.mxu0 0.0
    %264 = vmatpush.msra.mxu0 0.0
    %265 = vmatpush.msra.mxu0 0.0
    %266 = vmatpush.msra.mxu0 0.0
    %267 = vmatpush.msra.mxu0 0.0
    %268 = vmatpush.msra.mxu0 %v138
    %269 = vmatpush.msra.mxu0 %v136
    %270 = vmatpush.msra.mxu0 %v134
    %271 = vmatpush.msra.mxu0 %v132
    %272 = vmatpush.msra.mxu0 %v130
    %273 = vmatpush.msra.mxu0 %v128
    %274 = vmatpush.msra.mxu0 %v126
    %275 = vmatpush.msra.mxu0 %v124
    %276 = vmatmul.f32.gmra.mxu0 %v238
    %v277 = vpop.f32.mrf.mxu0
    %v278 = vadd.f32 0.0, %v277
    %279 = vdwg.mxu0
    %v282 = vrot.slane %v258, 6
    %v283 = vrot.slane %v278, 6
    %v286 = vadd.f32 %v95, %v282
    %v287 = vadd.f32 %v118, %v283
    %v288 = vxor.u32 %v286, 2147483648
    %v289 = vxor.u32 %v287, 2147483648
    %v290 = vmul.f32 %v288, 1.442695
    %v291 = vpow.pop %v290
    %v292 = vmul.f32 %v289, 1.442695
    %v293 = vpow.pop %v292
    %v294 = vadd.f32 %v291, 1.0
    %v295 = vadd.f32 %v293, 1.0
    %v296 = vrcp.pop %v294
    %v297 = vmul.f32 %v294, %v296
    %v298 = vsub.f32 1.0, %v297
    %v299 = vmul.f32 %v296, %v298
    %v300 = vadd.f32 %v296, %v299
    %vm301 = vweird.f32 %v294
    %vm302 = vweird.f32 %v296
    %vm303 = vmor %vm301, %vm302
    %v304 = vsel %vm303, %v296, %v300
    %v305 = vand.u32 2147483647, %v294
    %vm306 = vcmp.eq.f32.partialorder %v305, 8.507059e+37
    %v307 = vand.u32 %v294, 2147483648
    %v308 = vor.u32 1.1754944e-38, %v307
    %v309 = vsel %vm306, %v308, %v304
    %v310 = vmul.f32 1.0, %v309
    %v311 = vrcp.pop %v295
    %v312 = vmul.f32 %v295, %v311
    %v313 = vsub.f32 1.0, %v312
    %v314 = vmul.f32 %v311, %v313
    %v315 = vadd.f32 %v311, %v314
    %vm316 = vweird.f32 %v295
    %vm317 = vweird.f32 %v311
    %vm318 = vmor %vm316, %vm317
    %v319 = vsel %vm318, %v311, %v315
    %v320 = vand.u32 2147483647, %v295
    %vm321 = vcmp.eq.f32.partialorder %v320, 8.507059e+37
    %v322 = vand.u32 %v295, 2147483648
    %v323 = vor.u32 1.1754944e-38, %v322
    %v324 = vsel %vm321, %v323, %v319
    %v325 = vmul.f32 1.0, %v324
    %v326 = vtanh.pop %v287
    %v328 = vrot.slane %v230, 6
    %v330 = vmul.f32 %v310, %v328
    %v331 = vmul.f32 %v310, %v326
    %333 = vrot.lane.b32.xlu0 %v331, 64
    %v334 = vpop.permute.xlu0 %333
    %v336 = vadd.f32 %v330, %v334
    %v337 = vtanh.pop %v336
    %v338 = vmul.f32 %v325, %v337
    %v339 = vmax.f32 %v338, 0.0
    %v341 = vrot.slane %v339, 2
    %v343 = vadd.f32 %v234, %v341
    %v345 = vrot.slane %v338, 2
    %346 = vrot.lane.b32.xlu0 %v345, 64
    %v347 = vpop.permute.xlu0 %346
    %v348 = vsel %vm139, %v347, 0
    %350 = vmatpush.msra.mxu0 0.0
    %351 = vmatpush.msra.mxu0 0.0
    %352 = vmatpush.msra.mxu0 0.0
    %353 = vmatpush.msra.mxu0 0.0
    %354 = vmatpush.msra.mxu0 0.0
    %355 = vmatpush.msra.mxu0 0.0
    %356 = vmatpush.msra.mxu0 0.0
    %357 = vmatpush.msra.mxu0 0.0
    %358 = vmatpush.msra.mxu0 %v137
    %359 = vmatpush.msra.mxu0 %v135
    %360 = vmatpush.msra.mxu0 %v133
    %361 = vmatpush.msra.mxu0 %v131
    %362 = vmatpush.msra.mxu0 %v129
    %363 = vmatpush.msra.mxu0 %v127
    %364 = vmatpush.msra.mxu0 %v125
    %365 = vmatpush.msra.mxu0 %v123
    %366 = vmatmul.f32.gmra.mxu0 %v348
    %v367 = vpop.f32.mrf.mxu0
    %v368 = vadd.f32 0.0, %v367
    %369 = vdwg.mxu0
    %370 = vmatpush.msra.mxu0 0.0
    %371 = vmatpush.msra.mxu0 0.0
    %372 = vmatpush.msra.mxu0 0.0
    %373 = vmatpush.msra.mxu0 0.0
    %374 = vmatpush.msra.mxu0 0.0
    %375 = vmatpush.msra.mxu0 0.0
    %376 = vmatpush.msra.mxu0 0.0
    %377 = vmatpush.msra.mxu0 0.0
    %378 = vmatpush.msra.mxu0 %v138
    %379 = vmatpush.msra.mxu0 %v136
    %380 = vmatpush.msra.mxu0 %v134
    %381 = vmatpush.msra.mxu0 %v132
    %382 = vmatpush.msra.mxu0 %v130
    %383 = vmatpush.msra.mxu0 %v128
    %384 = vmatpush.msra.mxu0 %v126
    %385 = vmatpush.msra.mxu0 %v124
    %386 = vmatmul.f32.gmra.mxu0 %v348
    %v387 = vpop.f32.mrf.mxu0
    %v388 = vadd.f32 0.0, %v387
    %389 = vdwg.mxu0
    %v392 = vrot.slane %v368, 4
    %v393 = vrot.slane %v388, 4
    %v396 = vadd.f32 %v95, %v392
    %v397 = vadd.f32 %v118, %v393
    %v398 = vxor.u32 %v396, 2147483648
    %v399 = vxor.u32 %v397, 2147483648
    %v400 = vmul.f32 %v398, 1.442695
    %v401 = vpow.pop %v400
    %v402 = vmul.f32 %v399, 1.442695
    %v403 = vpow.pop %v402
    %v404 = vadd.f32 %v401, 1.0
    %v405 = vadd.f32 %v403, 1.0
    %v406 = vrcp.pop %v404
    %v407 = vmul.f32 %v404, %v406
    %v408 = vsub.f32 1.0, %v407
    %v409 = vmul.f32 %v406, %v408
    %v410 = vadd.f32 %v406, %v409
    %vm411 = vweird.f32 %v404
    %vm412 = vweird.f32 %v406
    %vm413 = vmor %vm411, %vm412
    %v414 = vsel %vm413, %v406, %v410
    %v415 = vand.u32 2147483647, %v404
    %vm416 = vcmp.eq.f32.partialorder %v415, 8.507059e+37
    %v417 = vand.u32 %v404, 2147483648
    %v418 = vor.u32 1.1754944e-38, %v417
    %v419 = vsel %vm416, %v418, %v414
    %v420 = vmul.f32 1.0, %v419
    %v421 = vrcp.pop %v405
    %v422 = vmul.f32 %v405, %v421
    %v423 = vsub.f32 1.0, %v422
    %v424 = vmul.f32 %v421, %v423
    %v425 = vadd.f32 %v421, %v424
    %vm426 = vweird.f32 %v405
    %vm427 = vweird.f32 %v421
    %vm428 = vmor %vm426, %vm427
    %v429 = vsel %vm428, %v421, %v425
    %v430 = vand.u32 2147483647, %v405
    %vm431 = vcmp.eq.f32.partialorder %v430, 8.507059e+37
    %v432 = vand.u32 %v405, 2147483648
    %v433 = vor.u32 1.1754944e-38, %v432
    %v434 = vsel %vm431, %v433, %v429
    %v435 = vmul.f32 1.0, %v434
    %v436 = vtanh.pop %v397
    %v438 = vrot.slane %v336, 6
    %v440 = vmul.f32 %v420, %v438
    %v441 = vmul.f32 %v420, %v436
    %443 = vrot.lane.b32.xlu0 %v441, 64
    %v444 = vpop.permute.xlu0 %443
    %v446 = vadd.f32 %v440, %v444
    %v447 = vtanh.pop %v446
    %v448 = vmul.f32 %v435, %v447
    %v449 = vmax.f32 %v448, 0.0
    %v451 = vrot.slane %v449, 4
    %v453 = vadd.f32 %v343, %v451
    %v455 = vrot.slane %v448, 4
    %456 = vrot.lane.b32.xlu0 %v455, 64
    %v457 = vpop.permute.xlu0 %456
    %v458 = vsel %vm139, %v457, 0
    %460 = vmatpush.msra.mxu0 0.0
    %461 = vmatpush.msra.mxu0 0.0
    %462 = vmatpush.msra.mxu0 0.0
    %463 = vmatpush.msra.mxu0 0.0
    %464 = vmatpush.msra.mxu0 0.0
    %465 = vmatpush.msra.mxu0 0.0
    %466 = vmatpush.msra.mxu0 0.0
    %467 = vmatpush.msra.mxu0 0.0
    %468 = vmatpush.msra.mxu0 %v137
    %469 = vmatpush.msra.mxu0 %v135
    %470 = vmatpush.msra.mxu0 %v133
    %471 = vmatpush.msra.mxu0 %v131
    %472 = vmatpush.msra.mxu0 %v129
    %473 = vmatpush.msra.mxu0 %v127
    %474 = vmatpush.msra.mxu0 %v125
    %475 = vmatpush.msra.mxu0 %v123
    %476 = vmatmul.f32.gmra.mxu0 %v458
    %v477 = vpop.f32.mrf.mxu0
    %v478 = vadd.f32 0.0, %v477
    %479 = vdwg.mxu0
    %480 = vmatpush.msra.mxu0 0.0
    %481 = vmatpush.msra.mxu0 0.0
    %482 = vmatpush.msra.mxu0 0.0
    %483 = vmatpush.msra.mxu0 0.0
    %484 = vmatpush.msra.mxu0 0.0
    %485 = vmatpush.msra.mxu0 0.0
    %486 = vmatpush.msra.mxu0 0.0
    %487 = vmatpush.msra.mxu0 0.0
    %488 = vmatpush.msra.mxu0 %v138
    %489 = vmatpush.msra.mxu0 %v136
    %490 = vmatpush.msra.mxu0 %v134
    %491 = vmatpush.msra.mxu0 %v132
    %492 = vmatpush.msra.mxu0 %v130
    %493 = vmatpush.msra.mxu0 %v128
    %494 = vmatpush.msra.mxu0 %v126
    %495 = vmatpush.msra.mxu0 %v124
    %496 = vmatmul.f32.gmra.mxu0 %v458
    %v497 = vpop.f32.mrf.mxu0
    %v498 = vadd.f32 0.0, %v497
    %499 = vdwg.mxu0
    %v502 = vrot.slane %v478, 2
    %v503 = vrot.slane %v498, 2
    %v506 = vadd.f32 %v95, %v502
    %v507 = vadd.f32 %v118, %v503
    %v508 = vxor.u32 %v506, 2147483648
    %v509 = vxor.u32 %v507, 2147483648
    %v510 = vmul.f32 %v508, 1.442695
    %v511 = vpow.pop %v510
    %v512 = vmul.f32 %v509, 1.442695
    %v513 = vpow.pop %v512
    %v514 = vadd.f32 %v511, 1.0
    %v515 = vadd.f32 %v513, 1.0
    %v516 = vrcp.pop %v514
    %v517 = vmul.f32 %v514, %v516
    %v518 = vsub.f32 1.0, %v517
    %v519 = vmul.f32 %v516, %v518
    %v520 = vadd.f32 %v516, %v519
    %vm521 = vweird.f32 %v514
    %vm522 = vweird.f32 %v516
    %vm523 = vmor %vm521, %vm522
    %v524 = vsel %vm523, %v516, %v520
    %v525 = vand.u32 2147483647, %v514
    %vm526 = vcmp.eq.f32.partialorder %v525, 8.507059e+37
    %v527 = vand.u32 %v514, 2147483648
    %v528 = vor.u32 1.1754944e-38, %v527
    %v529 = vsel %vm526, %v528, %v524
    %v530 = vmul.f32 1.0, %v529
    %v531 = vrcp.pop %v515
    %v532 = vmul.f32 %v515, %v531
    %v533 = vsub.f32 1.0, %v532
    %v534 = vmul.f32 %v531, %v533
    %v535 = vadd.f32 %v531, %v534
    %vm536 = vweird.f32 %v515
    %vm537 = vweird.f32 %v531
    %vm538 = vmor %vm536, %vm537
    %v539 = vsel %vm538, %v531, %v535
    %v540 = vand.u32 2147483647, %v515
    %vm541 = vcmp.eq.f32.partialorder %v540, 8.507059e+37
    %v542 = vand.u32 %v515, 2147483648
    %v543 = vor.u32 1.1754944e-38, %v542
    %v544 = vsel %vm541, %v543, %v539
    %v545 = vmul.f32 1.0, %v544
    %v546 = vtanh.pop %v507
    %v548 = vrot.slane %v446, 6
    %v550 = vmul.f32 %v530, %v548
    %v551 = vmul.f32 %v530, %v546
    %553 = vrot.lane.b32.xlu0 %v551, 64
    %v554 = vpop.permute.xlu0 %553
    %v556 = vadd.f32 %v550, %v554
    %v557 = vtanh.pop %v556
    %v558 = vmul.f32 %v545, %v557
    %v559 = vmax.f32 %v558, 0.0
    %v561 = vrot.slane %v559, 6
    %v563 = vadd.f32 %v453, %v561
    %v565 = vrot.slane %v558, 6
    %566 = vrot.lane.b32.xlu0 %v565, 64
    %v567 = vpop.permute.xlu0 %566
    %v568 = vsel %vm139, %v567, 0
    %570 = vmatpush.msra.mxu0 0.0
    %571 = vmatpush.msra.mxu0 0.0
    %572 = vmatpush.msra.mxu0 0.0
    %573 = vmatpush.msra.mxu0 0.0
    %574 = vmatpush.msra.mxu0 0.0
    %575 = vmatpush.msra.mxu0 0.0
    %576 = vmatpush.msra.mxu0 0.0
    %577 = vmatpush.msra.mxu0 0.0
    %578 = vmatpush.msra.mxu0 %v137
    %579 = vmatpush.msra.mxu0 %v135
    %580 = vmatpush.msra.mxu0 %v133
    %581 = vmatpush.msra.mxu0 %v131
    %582 = vmatpush.msra.mxu0 %v129
    %583 = vmatpush.msra.mxu0 %v127
    %584 = vmatpush.msra.mxu0 %v125
    %585 = vmatpush.msra.mxu0 %v123
    %586 = vmatmul.f32.gmra.mxu0 %v568
    %v587 = vpop.f32.mrf.mxu0
    %v588 = vadd.f32 0.0, %v587
    %589 = vdwg.mxu0
    %590 = vmatpush.msra.mxu0 0.0
    %591 = vmatpush.msra.mxu0 0.0
    %592 = vmatpush.msra.mxu0 0.0
    %593 = vmatpush.msra.mxu0 0.0
    %594 = vmatpush.msra.mxu0 0.0
    %595 = vmatpush.msra.mxu0 0.0
    %596 = vmatpush.msra.mxu0 0.0
    %597 = vmatpush.msra.mxu0 0.0
    %598 = vmatpush.msra.mxu0 %v138
    %599 = vmatpush.msra.mxu0 %v136
    %600 = vmatpush.msra.mxu0 %v134
    %601 = vmatpush.msra.mxu0 %v132
    %602 = vmatpush.msra.mxu0 %v130
    %603 = vmatpush.msra.mxu0 %v128
    %604 = vmatpush.msra.mxu0 %v126
    %605 = vmatpush.msra.mxu0 %v124
    %606 = vmatmul.f32.gmra.mxu0 %v568
    %v607 = vpop.f32.mrf.mxu0
    %v608 = vadd.f32 0.0, %v607
    %609 = vdwg.mxu0
    %v610 = vadd.f32 %v98, %v588
    %v611 = vadd.f32 %v121, %v608
    %v612 = vxor.u32 %v610, 2147483648
    %v613 = vxor.u32 %v611, 2147483648
    %v614 = vmul.f32 %v612, 1.442695
    %v615 = vpow.pop %v614
    %v616 = vmul.f32 %v613, 1.442695
    %v617 = vpow.pop %v616
    %v618 = vadd.f32 %v615, 1.0
    %v619 = vadd.f32 %v617, 1.0
    %v620 = vrcp.pop %v618
    %v621 = vmul.f32 %v618, %v620
    %v622 = vsub.f32 1.0, %v621
    %v623 = vmul.f32 %v620, %v622
    %v624 = vadd.f32 %v620, %v623
    %vm625 = vweird.f32 %v618
    %vm626 = vweird.f32 %v620
    %vm627 = vmor %vm625, %vm626
    %v628 = vsel %vm627, %v620, %v624
    %v629 = vand.u32 2147483647, %v618
    %vm630 = vcmp.eq.f32.partialorder %v629, 8.507059e+37
    %v631 = vand.u32 %v618, 2147483648
    %v632 = vor.u32 1.1754944e-38, %v631
    %v633 = vsel %vm630, %v632, %v628
    %v634 = vmul.f32 1.0, %v633
    %v635 = vrcp.pop %v619
    %v636 = vmul.f32 %v619, %v635
    %v637 = vsub.f32 1.0, %v636
    %v638 = vmul.f32 %v635, %v637
    %v639 = vadd.f32 %v635, %v638
    %vm640 = vweird.f32 %v619
    %vm641 = vweird.f32 %v635
    %vm642 = vmor %vm640, %vm641
    %v643 = vsel %vm642, %v635, %v639
    %v644 = vand.u32 2147483647, %v619
    %vm645 = vcmp.eq.f32.partialorder %v644, 8.507059e+37
    %v646 = vand.u32 %v619, 2147483648
    %v647 = vor.u32 1.1754944e-38, %v646
    %v648 = vsel %vm645, %v647, %v643
    %v649 = vmul.f32 1.0, %v648
    %v650 = vtanh.pop %v611
    %v652 = vrot.slane %v556, 6
    %v654 = vmul.f32 %v634, %v652
    %v655 = vmul.f32 %v634, %v650
    %657 = vrot.lane.b32.xlu0 %v655, 64
    %v658 = vpop.permute.xlu0 %657
    %v660 = vadd.f32 %v654, %v658
    %v661 = vtanh.pop %v660
    %v662 = vmul.f32 %v649, %v661
    %v663 = vmax.f32 %v662, 0.0
    %v664 = vadd.f32 %v563, %v663
    %666 = vrot.lane.b32.xlu0 %v662, 64
    %v667 = vpop.permute.xlu0 %666
    %v668 = vsel %vm139, %v667, 0
    %670 = vmatpush.msra.mxu0 0.0
    %671 = vmatpush.msra.mxu0 0.0
    %672 = vmatpush.msra.mxu0 0.0
    %673 = vmatpush.msra.mxu0 0.0
    %674 = vmatpush.msra.mxu0 0.0
    %675 = vmatpush.msra.mxu0 0.0
    %676 = vmatpush.msra.mxu0 0.0
    %677 = vmatpush.msra.mxu0 0.0
    %678 = vmatpush.msra.mxu0 %v137
    %679 = vmatpush.msra.mxu0 %v135
    %680 = vmatpush.msra.mxu0 %v133
    %681 = vmatpush.msra.mxu0 %v131
    %682 = vmatpush.msra.mxu0 %v129
    %683 = vmatpush.msra.mxu0 %v127
    %684 = vmatpush.msra.mxu0 %v125
    %685 = vmatpush.msra.mxu0 %v123
    %686 = vmatmul.f32.gmra.mxu0 %v668
    %v687 = vpop.f32.mrf.mxu0
    %v688 = vadd.f32 0.0, %v687
    %689 = vdwg.mxu0
    %690 = vmatpush.msra.mxu0 0.0
    %691 = vmatpush.msra.mxu0 0.0
    %692 = vmatpush.msra.mxu0 0.0
    %693 = vmatpush.msra.mxu0 0.0
    %694 = vmatpush.msra.mxu0 0.0
    %695 = vmatpush.msra.mxu0 0.0
    %696 = vmatpush.msra.mxu0 0.0
    %697 = vmatpush.msra.mxu0 0.0
    %698 = vmatpush.msra.mxu0 %v138
    %699 = vmatpush.msra.mxu0 %v136
    %700 = vmatpush.msra.mxu0 %v134
    %701 = vmatpush.msra.mxu0 %v132
    %702 = vmatpush.msra.mxu0 %v130
    %703 = vmatpush.msra.mxu0 %v128
    %704 = vmatpush.msra.mxu0 %v126
    %705 = vmatpush.msra.mxu0 %v124
    %706 = vmatmul.f32.gmra.mxu0 %v668
    %v707 = vpop.f32.mrf.mxu0
    %v708 = vadd.f32 0.0, %v707
    %709 = vdwg.mxu0
    %v712 = vrot.slane %v688, 6
    %v713 = vrot.slane %v708, 6
    %v716 = vadd.f32 %v98, %v712
    %v717 = vadd.f32 %v121, %v713
    %v718 = vxor.u32 %v716, 2147483648
    %v719 = vxor.u32 %v717, 2147483648
    %v720 = vmul.f32 %v718, 1.442695
    %v721 = vpow.pop %v720
    %v722 = vmul.f32 %v719, 1.442695
    %v723 = vpow.pop %v722
    %v724 = vadd.f32 %v721, 1.0
    %v725 = vadd.f32 %v723, 1.0
    %v726 = vrcp.pop %v724
    %v727 = vmul.f32 %v724, %v726
    %v728 = vsub.f32 1.0, %v727
    %v729 = vmul.f32 %v726, %v728
    %v730 = vadd.f32 %v726, %v729
    %vm731 = vweird.f32 %v724
    %vm732 = vweird.f32 %v726
    %vm733 = vmor %vm731, %vm732
    %v734 = vsel %vm733, %v726, %v730
    %v735 = vand.u32 2147483647, %v724
    %vm736 = vcmp.eq.f32.partialorder %v735, 8.507059e+37
    %v737 = vand.u32 %v724, 2147483648
    %v738 = vor.u32 1.1754944e-38, %v737
    %v739 = vsel %vm736, %v738, %v734
    %v740 = vmul.f32 1.0, %v739
    %v741 = vrcp.pop %v725
    %v742 = vmul.f32 %v725, %v741
    %v743 = vsub.f32 1.0, %v742
    %v744 = vmul.f32 %v741, %v743
    %v745 = vadd.f32 %v741, %v744
    %vm746 = vweird.f32 %v725
    %vm747 = vweird.f32 %v741
    %vm748 = vmor %vm746, %vm747
    %v749 = vsel %vm748, %v741, %v745
    %v750 = vand.u32 2147483647, %v725
    %vm751 = vcmp.eq.f32.partialorder %v750, 8.507059e+37
    %v752 = vand.u32 %v725, 2147483648
    %v753 = vor.u32 1.1754944e-38, %v752
    %v754 = vsel %vm751, %v753, %v749
    %v755 = vmul.f32 1.0, %v754
    %v756 = vtanh.pop %v717
    %v758 = vrot.slane %v660, 6
    %v760 = vmul.f32 %v740, %v758
    %v761 = vmul.f32 %v740, %v756
    %763 = vrot.lane.b32.xlu0 %v761, 64
    %v764 = vpop.permute.xlu0 %763
    %v766 = vadd.f32 %v760, %v764
    %v767 = vtanh.pop %v766
    %v768 = vmul.f32 %v755, %v767
    %v769 = vmax.f32 %v768, 0.0
    %v771 = vrot.slane %v769, 2
    %v773 = vadd.f32 %v664, %v771
    %v775 = vrot.slane %v768, 2
    %776 = vrot.lane.b32.xlu0 %v775, 64
    %v777 = vpop.permute.xlu0 %776
    %v778 = vsel %vm139, %v777, 0
    %780 = vmatpush.msra.mxu0 0.0
    %781 = vmatpush.msra.mxu0 0.0
    %782 = vmatpush.msra.mxu0 0.0
    %783 = vmatpush.msra.mxu0 0.0
    %784 = vmatpush.msra.mxu0 0.0
    %785 = vmatpush.msra.mxu0 0.0
    %786 = vmatpush.msra.mxu0 0.0
    %787 = vmatpush.msra.mxu0 0.0
    %788 = vmatpush.msra.mxu0 %v137
    %789 = vmatpush.msra.mxu0 %v135
    %790 = vmatpush.msra.mxu0 %v133
    %791 = vmatpush.msra.mxu0 %v131
    %792 = vmatpush.msra.mxu0 %v129
    %793 = vmatpush.msra.mxu0 %v127
    %794 = vmatpush.msra.mxu0 %v125
    %795 = vmatpush.msra.mxu0 %v123
    %796 = vmatmul.f32.gmra.mxu0 %v778
    %v797 = vpop.f32.mrf.mxu0
    %v798 = vadd.f32 0.0, %v797
    %799 = vdwg.mxu0
    %800 = vmatpush.msra.mxu0 0.0
    %801 = vmatpush.msra.mxu0 0.0
    %802 = vmatpush.msra.mxu0 0.0
    %803 = vmatpush.msra.mxu0 0.0
    %804 = vmatpush.msra.mxu0 0.0
    %805 = vmatpush.msra.mxu0 0.0
    %806 = vmatpush.msra.mxu0 0.0
    %807 = vmatpush.msra.mxu0 0.0
    %808 = vmatpush.msra.mxu0 %v138
    %809 = vmatpush.msra.mxu0 %v136
    %810 = vmatpush.msra.mxu0 %v134
    %811 = vmatpush.msra.mxu0 %v132
    %812 = vmatpush.msra.mxu0 %v130
    %813 = vmatpush.msra.mxu0 %v128
    %814 = vmatpush.msra.mxu0 %v126
    %815 = vmatpush.msra.mxu0 %v124
    %816 = vmatmul.f32.gmra.mxu0 %v778
    %v817 = vpop.f32.mrf.mxu0
    %v818 = vadd.f32 0.0, %v817
    %819 = vdwg.mxu0
    %v822 = vrot.slane %v798, 4
    %v823 = vrot.slane %v818, 4
    %v826 = vadd.f32 %v98, %v822
    %v827 = vadd.f32 %v121, %v823
    %v828 = vxor.u32 %v826, 2147483648
    %v829 = vxor.u32 %v827, 2147483648
    %v830 = vmul.f32 %v828, 1.442695
    %v831 = vpow.pop %v830
    %v832 = vmul.f32 %v829, 1.442695
    %v833 = vpow.pop %v832
    %v834 = vadd.f32 %v831, 1.0
    %v835 = vadd.f32 %v833, 1.0
    %v836 = vrcp.pop %v834
    %v837 = vmul.f32 %v834, %v836
    %v838 = vsub.f32 1.0, %v837
    %v839 = vmul.f32 %v836, %v838
    %v840 = vadd.f32 %v836, %v839
    %vm841 = vweird.f32 %v834
    %vm842 = vweird.f32 %v836
    %vm843 = vmor %vm841, %vm842
    %v844 = vsel %vm843, %v836, %v840
    %v845 = vand.u32 2147483647, %v834
    %vm846 = vcmp.eq.f32.partialorder %v845, 8.507059e+37
    %v847 = vand.u32 %v834, 2147483648
    %v848 = vor.u32 1.1754944e-38, %v847
    %v849 = vsel %vm846, %v848, %v844
    %v850 = vmul.f32 1.0, %v849
    %v851 = vrcp.pop %v835
    %v852 = vmul.f32 %v835, %v851
    %v853 = vsub.f32 1.0, %v852
    %v854 = vmul.f32 %v851, %v853
    %v855 = vadd.f32 %v851, %v854
    %vm856 = vweird.f32 %v835
    %vm857 = vweird.f32 %v851
    %vm858 = vmor %vm856, %vm857
    %v859 = vsel %vm858, %v851, %v855
    %v860 = vand.u32 2147483647, %v835
    %vm861 = vcmp.eq.f32.partialorder %v860, 8.507059e+37
    %v862 = vand.u32 %v835, 2147483648
    %v863 = vor.u32 1.1754944e-38, %v862
    %v864 = vsel %vm861, %v863, %v859
    %v865 = vmul.f32 1.0, %v864
    %v866 = vtanh.pop %v827
    %v868 = vrot.slane %v766, 6
    %v870 = vmul.f32 %v850, %v868
    %v871 = vmul.f32 %v850, %v866
    %873 = vrot.lane.b32.xlu0 %v871, 64
    %v874 = vpop.permute.xlu0 %873
    %v876 = vadd.f32 %v870, %v874
    %v877 = vtanh.pop %v876
    %v878 = vmul.f32 %v865, %v877
    %v879 = vmax.f32 %v878, 0.0
    %v881 = vrot.slane %v879, 4
    %v883 = vadd.f32 %v773, %v881
    %v885 = vrot.slane %v878, 4
    %886 = vrot.lane.b32.xlu0 %v885, 64
    %v887 = vpop.permute.xlu0 %886
    %v888 = vsel %vm139, %v887, 0
    %890 = vmatpush.msra.mxu0 0.0
    %891 = vmatpush.msra.mxu0 0.0
    %892 = vmatpush.msra.mxu0 0.0
    %893 = vmatpush.msra.mxu0 0.0
    %894 = vmatpush.msra.mxu0 0.0
    %895 = vmatpush.msra.mxu0 0.0
    %896 = vmatpush.msra.mxu0 0.0
    %897 = vmatpush.msra.mxu0 0.0
    %898 = vmatpush.msra.mxu0 %v137
    %899 = vmatpush.msra.mxu0 %v135
    %900 = vmatpush.msra.mxu0 %v133
    %901 = vmatpush.msra.mxu0 %v131
    %902 = vmatpush.msra.mxu0 %v129
    %903 = vmatpush.msra.mxu0 %v127
    %904 = vmatpush.msra.mxu0 %v125
    %905 = vmatpush.msra.mxu0 %v123
    %906 = vmatmul.f32.gmra.mxu0 %v888
    %v907 = vpop.f32.mrf.mxu0
    %v908 = vadd.f32 0.0, %v907
    %909 = vdwg.mxu0
    %910 = vmatpush.msra.mxu0 0.0
    %911 = vmatpush.msra.mxu0 0.0
    %912 = vmatpush.msra.mxu0 0.0
    %913 = vmatpush.msra.mxu0 0.0
    %914 = vmatpush.msra.mxu0 0.0
    %915 = vmatpush.msra.mxu0 0.0
    %916 = vmatpush.msra.mxu0 0.0
    %917 = vmatpush.msra.mxu0 0.0
    %918 = vmatpush.msra.mxu0 %v138
    %919 = vmatpush.msra.mxu0 %v136
    %920 = vmatpush.msra.mxu0 %v134
    %921 = vmatpush.msra.mxu0 %v132
    %922 = vmatpush.msra.mxu0 %v130
    %923 = vmatpush.msra.mxu0 %v128
    %924 = vmatpush.msra.mxu0 %v126
    %925 = vmatpush.msra.mxu0 %v124
    %926 = vmatmul.f32.gmra.mxu0 %v888
    %v927 = vpop.f32.mrf.mxu0
    %v928 = vadd.f32 0.0, %v927
    %929 = vdwg.mxu0
    %v932 = vrot.slane %v908, 2
    %v933 = vrot.slane %v928, 2
    %v936 = vadd.f32 %v98, %v932
    %v937 = vadd.f32 %v121, %v933
    %v938 = vxor.u32 %v936, 2147483648
    %v939 = vxor.u32 %v937, 2147483648
    %v940 = vmul.f32 %v938, 1.442695
    %v941 = vpow.pop %v940
    %v942 = vmul.f32 %v939, 1.442695
    %v943 = vpow.pop %v942
    %v944 = vadd.f32 %v941, 1.0
    %v945 = vadd.f32 %v943, 1.0
    %v946 = vrcp.pop %v944
    %v947 = vmul.f32 %v944, %v946
    %v948 = vsub.f32 1.0, %v947
    %v949 = vmul.f32 %v946, %v948
    %v950 = vadd.f32 %v946, %v949
    %vm951 = vweird.f32 %v944
    %vm952 = vweird.f32 %v946
    %vm953 = vmor %vm951, %vm952
    %v954 = vsel %vm953, %v946, %v950
    %v955 = vand.u32 2147483647, %v944
    %vm956 = vcmp.eq.f32.partialorder %v955, 8.507059e+37
    %v957 = vand.u32 %v944, 2147483648
    %v958 = vor.u32 1.1754944e-38, %v957
    %v959 = vsel %vm956, %v958, %v954
    %v960 = vmul.f32 1.0, %v959
    %v961 = vrcp.pop %v945
    %v962 = vmul.f32 %v945, %v961
    %v963 = vsub.f32 1.0, %v962
    %v964 = vmul.f32 %v961, %v963
    %v965 = vadd.f32 %v961, %v964
    %vm966 = vweird.f32 %v945
    %vm967 = vweird.f32 %v961
    %vm968 = vmor %vm966, %vm967
    %v969 = vsel %vm968, %v961, %v965
    %v970 = vand.u32 2147483647, %v945
    %vm971 = vcmp.eq.f32.partialorder %v970, 8.507059e+37
    %v972 = vand.u32 %v945, 2147483648
    %v973 = vor.u32 1.1754944e-38, %v972
    %v974 = vsel %vm971, %v973, %v969
    %v975 = vmul.f32 1.0, %v974
    %v976 = vtanh.pop %v937
    %v978 = vrot.slane %v876, 6
    %v980 = vmul.f32 %v960, %v978
    %v981 = vmul.f32 %v960, %v976
    %983 = vrot.lane.b32.xlu0 %v981, 64
    %v984 = vpop.permute.xlu0 %983
    %v986 = vadd.f32 %v980, %v984
    %v987 = vtanh.pop %v986
    %v988 = vmul.f32 %v975, %v987
    %v989 = vmax.f32 %v988, 0.0
    %v991 = vrot.slane %v989, 6
    %v993 = vadd.f32 %v883, %v991
    %v994 = vmul.f32 %v993, 0.125
    %v995 = vld [vmem:[%s4] sm:$0xff]
    %v996 = vld [vmem:[%s4 + $0x8] sm:$0xff]
    %v997 = vld [vmem:[%s4 + $0x10] sm:$0xff]
    %v998 = vld [vmem:[%s4 + $0x18] sm:$0xff]
    %v999 = vld [vmem:[%s4 + $0x20] sm:$0xff]
    %v1000 = vld [vmem:[%s4 + $0x28] sm:$0xff]
    %v1001 = vld [vmem:[%s4 + $0x30] sm:$0xff]
    %v1002 = vld [vmem:[%s4 + $0x38] sm:$0xff]
    %v1003 = vld [vmem:[%s5] sm:$0x1]
    %v1005 = vperm.slane %v1003, 0
    %1008 = vrot.lane.b32.xlu0 %v994, 64
    %v1009 = vpop.permute.xlu0 %1008
    %v1010 = vsel %vm139, %v1009, 0
    %1012 = vmatpush.msra.mxu0 0.0
    %1013 = vmatpush.msra.mxu0 0.0
    %1014 = vmatpush.msra.mxu0 0.0
    %1015 = vmatpush.msra.mxu0 0.0
    %1016 = vmatpush.msra.mxu0 0.0
    %1017 = vmatpush.msra.mxu0 0.0
    %1018 = vmatpush.msra.mxu0 0.0
    %1019 = vmatpush.msra.mxu0 0.0
    %1020 = vmatpush.msra.mxu0 %v1002
    %1021 = vmatpush.msra.mxu0 %v1001
    %1022 = vmatpush.msra.mxu0 %v1000
    %1023 = vmatpush.msra.mxu0 %v999
    %1024 = vmatpush.msra.mxu0 %v998
    %1025 = vmatpush.msra.mxu0 %v997
    %1026 = vmatpush.msra.mxu0 %v996
    %1027 = vmatpush.msra.mxu0 %v995
    %1028 = vmatmul.f32.gmra.mxu0 %v1010
    %v1029 = vpop.f32.mrf.mxu0
    %v1030 = vadd.f32 %v1005, %v1029
    %1031 = vdwg.mxu0
    %v1032 = vld [vmem:[%s6] sm:$0xff]
    %v1033 = vld [vmem:[%s6 + $0x8] sm:$0xff]
    %v1034 = vld [vmem:[%s6 + $0x10] sm:$0xff]
    %v1035 = vld [vmem:[%s6 + $0x18] sm:$0xff]
    %v1036 = vld [vmem:[%s6 + $0x20] sm:$0xff]
    %v1037 = vld [vmem:[%s6 + $0x28] sm:$0xff]
    %v1038 = vld [vmem:[%s6 + $0x30] sm:$0xff]
    %v1039 = vld [vmem:[%s6 + $0x38] sm:$0xff]
    %v1040 = vld [vmem:[%s7] sm:$0x1]
    %v1042 = vperm.slane %v1040, 0
    %v1045 = vsel %vm139, %v1030, 0
    %1047 = vmatpush.msra.mxu0 0.0
    %1048 = vmatpush.msra.mxu0 0.0
    %1049 = vmatpush.msra.mxu0 0.0
    %1050 = vmatpush.msra.mxu0 0.0
    %1051 = vmatpush.msra.mxu0 0.0
    %1052 = vmatpush.msra.mxu0 0.0
    %1053 = vmatpush.msra.mxu0 0.0
    %1054 = vmatpush.msra.mxu0 0.0
    %1055 = vmatpush.msra.mxu0 %v1039
    %1056 = vmatpush.msra.mxu0 %v1038
    %1057 = vmatpush.msra.mxu0 %v1037
    %1058 = vmatpush.msra.mxu0 %v1036
    %1059 = vmatpush.msra.mxu0 %v1035
    %1060 = vmatpush.msra.mxu0 %v1034
    %1061 = vmatpush.msra.mxu0 %v1033
    %1062 = vmatpush.msra.mxu0 %v1032
    %1063 = vmatmul.f32.gmra.mxu0 %v1045
    %v1064 = vpop.f32.mrf.mxu0
    %v1065 = vadd.f32 %v1042, %v1064
    %1066 = vdwg.mxu0
    %v1067 = vmax.f32 %v1065, 0.0
    %v1068 = vld [vmem:[%s8] sm:$0xff]
    %v1069 = vld [vmem:[%s8 + $0x8] sm:$0xff]
    %v1070 = vld [vmem:[%s8 + $0x10] sm:$0xff]
    %v1071 = vld [vmem:[%s8 + $0x18] sm:$0xff]
    %v1072 = vld [vmem:[#allocation2] sm:$0x1]
    %v1074 = vperm.slane %v1072, 0
    %vm1076 = vcmask 261120
    %v1078 = vsel %vm1076, %v1067, 0
    %1080 = vmatpush.msra.mxu0 0.0
    %1081 = vmatpush.msra.mxu0 0.0
    %1082 = vmatpush.msra.mxu0 0.0
    %1083 = vmatpush.msra.mxu0 0.0
    %1084 = vmatpush.msra.mxu0 0.0
    %1085 = vmatpush.msra.mxu0 0.0
    %1086 = vmatpush.msra.mxu0 0.0
    %1087 = vmatpush.msra.mxu0 0.0
    %1088 = vmatpush.msra.mxu0 0.0
    %1089 = vmatpush.msra.mxu0 0.0
    %1090 = vmatpush.msra.mxu0 0.0
    %1091 = vmatpush.msra.mxu0 0.0
    %1092 = vmatpush.msra.mxu0 %v1071
    %1093 = vmatpush.msra.mxu0 %v1070
    %1094 = vmatpush.msra.mxu0 %v1069
    %1095 = vmatpush.msra.mxu0 %v1068
    %1096 = vmatmul.f32.gmra.mxu0 %v1078
    %v1097 = vpop.f32.mrf.mxu0
    %v1098 = vadd.f32 %v1074, %v1097
    %1099 = vdwg.mxu0
    %vm1100 = vcmask 1024
    %1101 = vst.msk [vmem:[%s10] sm:$0x3] %vm1100, %v1098
    // Predicated region
    $region46: #{tpu_custom_call.1} parent=1 // pred_check
      _
    $region47: #{tpu_custom_call.1} parent=1 // pred_check_branch
      %1103 = sbr.rel (0) target = $region49
    $region48: #{tpu_custom_call.1} parent=1 // pred_region
      _
    $region49: #{tpu_custom_call.1} parent=1 // pred_fallthru
      _
    // Predicated region
    $region50: #{tpu_custom_call.1} parent=1 // pred_check
      _
    $region51: #{tpu_custom_call.1} parent=1 // pred_check_branch
      %1105 = sbr.rel (0) target = $region53
    $region52: #{tpu_custom_call.1} parent=1 // pred_region
      _
    $region53: #{tpu_custom_call.1} parent=1 // pred_fallthru
      _
    %1106 = vsyncpa [#allocation4], 1

</llo_original>
